<compile_context>
chip_gen: v7x
topology: tpu7x:2x2x1
jax: 0.10.0
libtpu: 0.0.40
codegen_flags: <defaults>
</compile_context>

<pallas_src>
import functools
from abc import ABC, abstractmethod

import jax
import jax.numpy as jnp
from jax.experimental import pallas as pl
from jax.experimental.pallas import tpu as pltpu


# ----------------------------------------------------------------------------
# Pallas kernel: out = loss * weight, weight read from SMEM (scalar prefetch)
# ----------------------------------------------------------------------------
def _scale_kernel(w_ref, x_ref, o_ref):
    # Multiply in f32 in-register (VPU); store in the native output dtype so
    # HBM traffic stays at the input/output element width.
    w = w_ref[0]
    o_ref[...] = (x_ref[...].astype(jnp.float32) * w).astype(o_ref.dtype)


_LANE_WIDTHS = (1024, 512, 256, 128)   # lane-dense last dims to try (widest first)
_MIN_PALLAS_ELEMENTS = 1 << 16         # below this, a fused jnp multiply wins


@functools.lru_cache(maxsize=1)
def _target_block_bytes() -> int:
    """Per-generation block-size target (footprint = 2 buffers x (in+out) blocks)."""
    try:
        kind = jax.devices()[0].device_kind.lower()
    except Exception:  # pragma: no cover - defensive
        return 2 * 1024 * 1024
    if "v7" in kind:
        return 4 * 1024 * 1024   # 64 MiB physical / 32 MiB scoped VMEM: stay modest
    if "v6" in kind:
        return 6 * 1024 * 1024   # 128 MiB physical VMEM, ~1.4 TB/s HBM
    return 2 * 1024 * 1024       # v5e & older: 16 MiB scoped default


def _sublane_multiple(*dtypes) -> int:
    """Native sublane packing: 8 for 4-byte, 16 for 2-byte, 32 for 1-byte dtypes."""
    m = 8
    for dt in dtypes:
        size = jnp.dtype(dt).itemsize
        m = max(m, 32 // max(1, min(size, 4)))
    return m


def _round_up(x: int, m: int) -> int:
    return ((x + m - 1) // m) * m


def _pallas_scale_2d(x2d: jax.Array, weight_arr: jax.Array, out_dtype) -> jax.Array:
    """x2d: [R, C] with C a multiple of 128. weight_arr: f32[1] (SMEM prefetch)."""
    R, C = x2d.shape
    in_size = jnp.dtype(x2d.dtype).itemsize
    out_size = jnp.dtype(out_dtype).itemsize
    sublane = _sublane_multiple(x2d.dtype, out_dtype)

    target = _target_block_bytes()
    bytes_per_row = C * max(in_size, out_size)
    max_rows = max(sublane, target // bytes_per_row)

    if R <= 2 * sublane:
        block_rows = R                # full extent bypasses (8,128) divisibility
        grid = (1,)
    else:
        # >=2 grid steps so v7x megacore can split the grid and in/out DMA overlap.
        n_blocks = max(2, pl.cdiv(R, max_rows))
        block_rows = _round_up(pl.cdiv(R, n_blocks), sublane)
        grid = (pl.cdiv(R, block_rows),)   # ragged last row-block is masked by Pallas

    block_bytes = block_rows * C * (in_size + out_size)
    vmem_limit = max(2 * block_bytes + (4 << 20), 16 << 20)

    return pl.pallas_call(
        _scale_kernel,
        out_shape=jax.ShapeDtypeStruct((R, C), out_dtype),
        grid_spec=pltpu.PrefetchScalarGridSpec(
            num_scalar_prefetch=1,           # weight_arr lands in SMEM
            grid=grid,
            in_specs=[pl.BlockSpec((block_rows, C), lambda i, w: (i, 0))],
            out_specs=pl.BlockSpec((block_rows, C), lambda i, w: (i, 0)),
        ),
        compiler_params=pltpu.CompilerParams(
            dimension_semantics=("parallel",),
            vmem_limit_bytes=int(vmem_limit),
        ),
        cost_estimate=pl.CostEstimate(
            flops=R * C,
            transcendentals=0,
            bytes_accessed=R * C * (in_size + out_size),
        ),
    )(weight_arr, x2d)


def scale_by_loss_weight(loss: jax.Array, loss_weight) -> jax.Array:
    """Elementwise `loss * loss_weight` for arbitrary-shaped loss (incl. 0-d)."""
    loss = jnp.asarray(loss)
    # Match `loss * loss_weight` dtype promotion (python scalars are weak types).
    out_dtype = jnp.result_type(loss, loss_weight)

    # Trivial weight (the default): identity, no work at all.
    if (isinstance(loss_weight, (bool, int, float))
            and float(loss_weight) == 1.0
            and out_dtype == loss.dtype):
        return loss

    n = loss.size
    # Tiny / scalar losses (the common case): plain jnp multiply, fused by XLA
    # into the _forward producer — no kernel launch, no extra HBM passes.
    if n < _MIN_PALLAS_ELEMENTS:
        return loss * loss_weight

    orig_shape = loss.shape
    weight_arr = jnp.asarray(loss_weight, dtype=jnp.float32).reshape((1,))
    flat = loss.reshape((-1,))       # contiguous reshape, no copy

    # Pick the widest lane-dense slab that divides n (no pad in the common case).
    C = next((c for c in _LANE_WIDTHS if n % c == 0), None)
    if C is not None:
        y = _pallas_scale_2d(flat.reshape(n // C, C), weight_arr, out_dtype)
        return y.reshape(orig_shape)

    # Large ragged n (rare): aligned body through the kernel, <1024-element tail
    # in jnp.  No full-array jnp.pad / post-slice round-trips.
    body_n = (n // _LANE_WIDTHS[0]) * _LANE_WIDTHS[0]
    body = flat[:body_n].reshape(body_n // _LANE_WIDTHS[0], _LANE_WIDTHS[0])
    y_body = _pallas_scale_2d(body, weight_arr, out_dtype).reshape((-1,))
    y_tail = (flat[body_n:] * loss_weight).astype(out_dtype)
    # TODO(synk): the concatenate costs one extra pass over the body; a manual-DMA
    # flat-output kernel could avoid it, but this ragged-large case is rare.
    return jnp.concatenate([y_body, y_tail]).reshape(orig_shape)


# ----------------------------------------------------------------------------
# Module-equivalent classes
# ----------------------------------------------------------------------------
class BaseWeightedLoss(ABC):
    """JAX/Pallas port of dolphin.loss.base.BaseWeightedLoss."""

    def __init__(self, loss_weight=1.0, **kwargs):
        self.loss_weight = loss_weight
        self.kwargs = kwargs

    @abstractmethod
    def _forward(self, *args, **kwargs):
        # Abstract in the reference module as well.
        pass

    def forward(self, *args, **kwargs):
        # Matches the reference exactly (mutating merge of per-call kwargs).
        self.kwargs.update(kwargs)
        loss = self._forward(*args, **self.kwargs)
        # Hot path of the base class (`* self.loss_weight`) runs in Pallas.
        return scale_by_loss_weight(loss, self.loss_weight)

    __call__ = forward


class _DemoL2Loss(BaseWeightedLoss):
    """Minimal concrete subclass used only to exercise forward().

    # TODO(synk): `_forward` is abstract in the reference module; this demo
    # elementwise L2 is test glue, not part of BaseWeightedLoss itself.
    """

    def _forward(self, pred, target, **kwargs):
        return (pred - target) ** 2


# ----------------------------------------------------------------------------
# Demo / self-test
# ----------------------------------------------------------------------------
if __name__ == "__main__":
    key = jax.random.PRNGKey(0)
    k1, k2 = jax.random.split(key)

    loss_weight = 0.5
    loss_fn = _DemoL2Loss(loss_weight=loss_weight)

    # 1) Small NCHW loss (2048 elems): fused jnp path (no kernel launch).
    pred_s = jax.random.normal(k1, (2, 4, 16, 16), dtype=jnp.float32)
    target_s = jax.random.normal(k2, (2, 4, 16, 16), dtype=jnp.float32)
    out_s = jax.block_until_ready(loss_fn(pred_s, target_s))
    ref_s = ((pred_s - target_s) ** 2) * loss_weight
    assert out_s.shape == ref_s.shape and out_s.dtype == ref_s.dtype
    assert jnp.allclose(out_s, ref_s, atol=1e-6, rtol=1e-6)

    # 2) Large aligned f32 (131072 elems): Pallas path, [128, 1024] slab, grid >= 2.
    pred = jax.random.normal(k1, (2, 4, 128, 128), dtype=jnp.float32)
    target = jax.random.normal(k2, (2, 4, 128, 128), dtype=jnp.float32)
    out = jax.block_until_ready(loss_fn(pred, target))
    ref = ((pred - target) ** 2) * loss_weight
    assert out.shape == ref.shape and out.dtype == ref.dtype
    assert jnp.allclose(out, ref, atol=1e-6, rtol=1e-6)

    # 3) Large bf16: native-dtype HBM traffic, 16-row sublane alignment.
    pred_b = pred.astype(jnp.bfloat16)
    target_b = target.astype(jnp.bfloat16)
    out_b = jax.block_until_ready(loss_fn(pred_b, target_b))
    ref_b = ((pred_b - target_b) ** 2) * loss_weight
    assert out_b.shape == ref_b.shape and out_b.dtype == ref_b.dtype
    assert jnp.allclose(out_b.astype(jnp.float32), ref_b.astype(jnp.float32),
                        atol=1e-2, rtol=1e-2)

    # 4) Large ragged (72771 elems): aligned body in Pallas, 67-elem tail in jnp,
    #    ragged last row-block exercises Pallas boundary masking.
    pred_r = jax.random.normal(k1, (3, 191, 127), dtype=jnp.float32)
    target_r = jax.random.normal(k2, (3, 191, 127), dtype=jnp.float32)
    out_r = jax.block_until_ready(loss_fn(pred_r, target_r))
    ref_r = ((pred_r - target_r) ** 2) * loss_weight
    assert out_r.shape == ref_r.shape and out_r.dtype == ref_r.dtype
    assert jnp.allclose(out_r, ref_r, atol=1e-6, rtol=1e-6)

    # 5) loss_weight == 1.0 short-circuits to identity (the module's default).
    id_fn = _DemoL2Loss(loss_weight=1.0)
    out_i = jax.block_until_ready(id_fn(pred_s, target_s))
    assert jnp.allclose(out_i, (pred_s - target_s) ** 2, atol=1e-6, rtol=1e-6)

    # 6) Traced (array) loss_weight under jit goes through the SMEM-scalar path
    #    without recompiling per weight value.
    jit_scale = jax.jit(scale_by_loss_weight)
    out_j = jax.block_until_ready(jit_scale(pred, jnp.float32(0.25)))
    assert jnp.allclose(out_j, pred * 0.25, atol=1e-6, rtol=1e-6)

    print("KERNEL_OK")
</pallas_src>

<mosaic_0001>
module attributes {stable_mosaic.version = 11 : i64} {
  func.func @_scale_kernel(%arg0: i32, %arg1: memref<1xf32, #tpu.memory_space<smem>>, %arg2: memref<64x1024xf32, #tpu.memory_space<vmem>>, %arg3: memref<64x1024xf32, #tpu.memory_space<vmem>>) attributes {dimension_semantics = [#tpu.dimension_semantics<parallel>], iteration_bounds = array<i64: 2>, scalar_prefetch = 1 : i64, scratch_operands = 0 : i64, tpu.core_type = #tpu.core_type<tc>, window_params = [{transform_indices = @transform_0, window_bounds = array<i64: 64, 1024>}, {transform_indices = @transform_1, window_bounds = array<i64: 64, 1024>}]} {
    %c0 = arith.constant 0 : index
    %0 = memref.load %arg1[%c0] : memref<1xf32, #tpu.memory_space<smem>>
    %c0_0 = arith.constant 0 : index
    %c0_1 = arith.constant 0 : index
    %1 = vector.load %arg2[%c0_0, %c0_1] : memref<64x1024xf32, #tpu.memory_space<vmem>>, vector<64x1024xf32>
    %2 = vector.broadcast %0 : f32 to vector<64x1024xf32>
    %3 = arith.mulf %1, %2 : vector<64x1024xf32>
    %c0_2 = arith.constant 0 : index
    %c0_3 = arith.constant 0 : index
    %4 = vector.load %arg3[%c0_2, %c0_3] : memref<64x1024xf32, #tpu.memory_space<vmem>>, vector<64x1024xf32>
    tpu.vector_store %arg3[%c0_2, %c0_3], %3 {strides = array<i32>} : memref<64x1024xf32, #tpu.memory_space<vmem>>, vector<64x1024xf32>,
    return
  }
  func.func @transform_0(%arg0: i32, %arg1: memref<1xf32, #tpu.memory_space<smem>>) -> (i32, i32) {
    %c0_i32 = arith.constant 0 : i32
    %c0_i32_0 = arith.constant 0 : i32
    return %arg0, %c0_i32 : i32, i32
  }
  func.func @transform_1(%arg0: i32, %arg1: memref<1xf32, #tpu.memory_space<smem>>) -> (i32, i32) {
    %c0_i32 = arith.constant 0 : i32
    %c0_i32_0 = arith.constant 0 : i32
    return %arg0, %c0_i32 : i32, i32
  }
}

</mosaic_0001>

<llo_original>
// kernel: tpu_custom_call.1
$region0: #{tpu_custom_call.1}
  #allocation0 [shape = 'u32[]', space=smem, size = 0x4, offset = 0x4, fixed_abs, tag = 'smem constant byte address 0x4 - core index']
  #allocation1 [shape = 'u32[144,128]{1,0:T(1,128)}', space=vmem, size = 0x12000, scoped, tag = 'internal scratch']
  #allocation2 [shape = 's32[1]{0}', space=sflag, size = 0x4, scoped, tag = 'scoped memory for tpu_custom_call.1']
  #allocation3 [shape = 'f32[1]{0:T(128)S(6)}', space=smem, size = 0x200, scoped, tag = 'prefetched SMEM operand 0']
  %s0 = inlined_call_operand.<no memory space> [shape: f32[1], index: 0, kind: input, shape index: {}]
  %s1 = inlined_call_operand.hbm [shape: f32[128,1024], index: 1, kind: input, shape index: {}]
  %s2 = inlined_call_operand.hbm [shape: f32[128,1024], index: 2, kind: output, shape index: {}]
  %s3 = sld [smem:[#allocation0]]
  $region41: #{tpu_custom_call.1} parent=0
    _
  %s5 = ssub.s32 1, %s3
  %s6 = scalar_select 0, %s5, %s3
  %7 = sst [smem:[#allocation3]] %s0
  $region1: #{tpu_custom_call.1} parent=0
    #allocation4 [shape = 'u8[524288]{0}', space=vmem, size = 0x80000, scoped, tag = 'input window, operand 1']
    #allocation5 [shape = 's32[2]{0}', space=sflag, size = 0x8, scoped, tag = 'scoped memory for tpu_custom_call.1']
    #allocation6 [shape = 's32[2]{0}', space=sflag, size = 0x8, scoped, tag = 'scoped memory for tpu_custom_call.1']
    #allocation7 [shape = 'u8[524288]{0}', space=vmem, size = 0x80000, scoped, tag = 'output window, operand 0']
    %8 = vsyncpa [#allocation5], 0
    %s9 = scalar_lea.sflag [#allocation5], 1
    %10 = vsyncpa %s9, 0
    %11 = vsyncpa [#allocation6], 0
    %s12 = scalar_lea.sflag [#allocation6], 1
    %13 = vsyncpa %s12, 0
    loop: start=0, step=1, limit=4
    $region2: #{tpu_custom_call.1} parent=1 // loop_pre_header
      _
    $region3: #{tpu_custom_call.1} parent=1 // loop_header
      %s15 = sphi 0, %s19
      %p16 = scmp.ge.s32.totalorder %s15, 4
      %s25 = sphi 0, %s27
      %s28 = sphi 0, %s25
      %s29 = sphi 0, %s28
      %s45 = sphi 0, %s29
      %s51 = sphi 0, %s53
      %s54 = sphi 0, %s51
      %s55 = sphi 0, %s54
      %s71 = sphi 0, %s55
    $region4: #{tpu_custom_call.1} parent=1 // loop_header_branch
      %18 = sbr.rel (%p16) target = $region8
    $region5: #{tpu_custom_call.1} parent=1 // loop_body
      %s20 = ssub.s32 %s15, 1
      %s21 = ssub.s32 %s15, 2
      %s22 = sadd.s32 %s15, 1
      %s23 = ssub.s32 %s15, %s22
      %p24 = scmp.eq.s32.totalorder %s23, 0
      %s26 = sadd.s32 %s25, 1
      %s27 = scalar_select %p24, %s25, %s26
      %p30 = pneg %p24
      %p31 = scmp.eq.s32.totalorder %s15, 1
      %p32 = por %p30, %p31
      %p33 = scmp.ne.s32.totalorder %s25, %s28
      %p34 = scmp.eq.s32.totalorder %s15, 0
      %p35 = por %p33, %p34
      %p36 = scmp.ne.s32.totalorder %s25, %s28
      %p37 = scmp.eq.s32.totalorder %s20, 1
      %p38 = por %p36, %p37
      %p39 = scmp.ne.s32.totalorder %s28, %s29
      %p40 = scmp.eq.s32.totalorder %s20, 0
      %p41 = por %p39, %p40
      %p42 = scmp.ne.s32.totalorder %s28, %s29
      %p43 = scmp.eq.s32.totalorder %s21, 1
      %p44 = por %p42, %p43
      %p46 = scmp.ne.s32.totalorder %s29, %s45
      %p47 = scmp.eq.s32.totalorder %s21, 0
      %p48 = por %p46, %p47
      %s49 = ssub.s32 %s15, %s22
      %p50 = scmp.eq.s32.totalorder %s49, 0
      %s52 = sadd.s32 %s51, 1
      %s53 = scalar_select %p50, %s51, %s52
      %p56 = pneg %p50
      %p57 = scmp.eq.s32.totalorder %s15, 1
      %p58 = por %p56, %p57
      %p59 = scmp.ne.s32.totalorder %s51, %s54
      %p60 = scmp.eq.s32.totalorder %s15, 0
      %p61 = por %p59, %p60
      %p62 = scmp.ne.s32.totalorder %s51, %s54
      %p63 = scmp.eq.s32.totalorder %s20, 1
      %p64 = por %p62, %p63
      %p65 = scmp.ne.s32.totalorder %s54, %s55
      %p66 = scmp.eq.s32.totalorder %s20, 0
      %p67 = por %p65, %p66
      %p68 = scmp.ne.s32.totalorder %s54, %s55
      %p69 = scmp.eq.s32.totalorder %s21, 1
      %p70 = por %p68, %p69
      %p72 = scmp.ne.s32.totalorder %s55, %s71
      %p73 = scmp.eq.s32.totalorder %s21, 0
      %p74 = por %p72, %p73
      %p75 = scmp.le.s32.totalorder 1, %s15
      %p76 = scmp.lt.s32.totalorder %s15, 3
      %p77 = pnand %p75, %p76
      %p78 = pneg %p77
      // Predicated region
      $region9: #{tpu_custom_call.1} parent=5 // pred_check
        _
      $region10: #{tpu_custom_call.1} parent=5 // pred_check_branch
        %80 = sbr.rel (%p77) target = $region12
      $region11: #{tpu_custom_call.1} parent=5 // pred_region
        %s81 = ssub.s32 %s15, 1
      $region12: #{tpu_custom_call.1} parent=5 // pred_fallthru
        _
      %p82 = scmp.lt.s32.totalorder %s15, 2
      // Predicated region
      $region13: #{tpu_custom_call.1} parent=5 // pred_check
        %p83 = pneg %p82
      $region14: #{tpu_custom_call.1} parent=5 // pred_check_branch
        %85 = sbr.rel (%p83) target = $region16
      $region15: #{tpu_custom_call.1} parent=5 // pred_region
        // Predicated region
        $region17: #{tpu_custom_call.1} parent=15 // pred_check
          %p86 = pneg %p35
        $region18: #{tpu_custom_call.1} parent=15 // pred_check_branch
          %88 = sbr.rel (%p86) target = $region20
        $region19: #{tpu_custom_call.1} parent=15 // pred_region
          %s89 = sand.u32 %s25, 1
          %s90 = scalar_lea.sflag [#allocation5], %s89
          %s91 = sand.u32 %s25, 1
          %s92 = smul.addr %s91, 512
          %s93 = scalar_lea.vmem [#allocation4], %s92
          %s94 = smul.u32 8, %s15
          %s96 = ssub.s32 8192, 8192
          %97 = vsyncadd %s90, %s96
          %s98 = smul.addr %s94, 8
          %s99 = smul.addr %s98, 128
          %s100 = scalar_lea.hbm %s1, %s99
          %s101 = sshll.u32 %s93, 4
          %s102 = int_to_ptr.vmem [resolvable:$true] %s101
          %107 = dma.hbm_to_vmem [thread:$0]  %s100, 8192, %s102, %s90, 1024, 1024, 64
        $region20: #{tpu_custom_call.1} parent=15 // pred_fallthru
          _
      $region16: #{tpu_custom_call.1} parent=5 // pred_fallthru
        _
      %p108 = scmp.le.s32.totalorder 1, %s15
      %p109 = scmp.lt.s32.totalorder %s15, 3
      %p110 = pnand %p108, %p109
      %p111 = pneg %p110
      // Predicated region
      $region21: #{tpu_custom_call.1} parent=5 // pred_check
        _
      $region22: #{tpu_custom_call.1} parent=5 // pred_check_branch
        %113 = sbr.rel (%p110) target = $region24
      $region23: #{tpu_custom_call.1} parent=5 // pred_region
        %s114 = ssub.s32 %s15, 1
        %s115 = sand.u32 %s28, 1
        %s116 = scalar_lea.sflag [#allocation5], %s115
        %s117 = sand.u32 %s28, 1
        %s118 = smul.addr %s117, 512
        %s119 = scalar_lea.vmem [#allocation4], %s118
        // Predicated region
        $region25: #{tpu_custom_call.1} parent=23 // pred_check
          %p120 = pneg %p41
        $region26: #{tpu_custom_call.1} parent=23 // pred_check_branch
          %122 = sbr.rel (%p120) target = $region28
        $region27: #{tpu_custom_call.1} parent=23 // pred_region
          %123 = dma.done %s116, 8192
        $region28: #{tpu_custom_call.1} parent=23 // pred_fallthru
          _
        %s124 = sand.u32 %s28, 1
        %s125 = scalar_lea.sflag [#allocation5], %s124
        %s126 = sand.u32 %s28, 1
        %s127 = smul.addr %s126, 512
        %s128 = scalar_lea.vmem [#allocation4], %s127
        %p129 = pneg %p41
        %p130 = pneg %p38
        %p131 = pneg %p67
        %p132 = pneg %p64
        %s133 = sand.u32 %s54, 1
        %s134 = scalar_lea.sflag [#allocation6], %s133
        %s135 = sand.u32 %s54, 1
        %s136 = smul.addr %s135, 512
        %s137 = scalar_lea.vmem [#allocation7], %s136
        %s138 = smul.u32 8, %s20
        %s139 = smul.u32 8, %s20
        %s140 = sld [smem:[#allocation3]]
        %v141 = vld [vmem:[%s119] sm:$0xff]
        %v142 = vld [vmem:[%s119 + $0x8] sm:$0xff]
        %v143 = vld [vmem:[%s119 + $0x10] sm:$0xff]
        %v144 = vld [vmem:[%s119 + $0x18] sm:$0xff]
        %v145 = vld [vmem:[%s119 + $0x20] sm:$0xff]
        %v146 = vld [vmem:[%s119 + $0x28] sm:$0xff]
        %v147 = vld [vmem:[%s119 + $0x30] sm:$0xff]
        %v148 = vld [vmem:[%s119 + $0x38] sm:$0xff]
        %v149 = vld [vmem:[%s119 + $0x40] sm:$0xff]
        %v150 = vld [vmem:[%s119 + $0x48] sm:$0xff]
        %v151 = vld [vmem:[%s119 + $0x50] sm:$0xff]
        %v152 = vld [vmem:[%s119 + $0x58] sm:$0xff]
        %v153 = vld [vmem:[%s119 + $0x60] sm:$0xff]
        %v154 = vld [vmem:[%s119 + $0x68] sm:$0xff]
        %v155 = vld [vmem:[%s119 + $0x70] sm:$0xff]
        %v156 = vld [vmem:[%s119 + $0x78] sm:$0xff]
        %v157 = vld [vmem:[%s119 + $0x80] sm:$0xff]
        %v158 = vld [vmem:[%s119 + $0x88] sm:$0xff]
        %v159 = vld [vmem:[%s119 + $0x90] sm:$0xff]
        %v160 = vld [vmem:[%s119 + $0x98] sm:$0xff]
        %v161 = vld [vmem:[%s119 + $0xa0] sm:$0xff]
        %v162 = vld [vmem:[%s119 + $0xa8] sm:$0xff]
        %v163 = vld [vmem:[%s119 + $0xb0] sm:$0xff]
        %v164 = vld [vmem:[%s119 + $0xb8] sm:$0xff]
        %v165 = vld [vmem:[%s119 + $0xc0] sm:$0xff]
        %v166 = vld [vmem:[%s119 + $0xc8] sm:$0xff]
        %v167 = vld [vmem:[%s119 + $0xd0] sm:$0xff]
        %v168 = vld [vmem:[%s119 + $0xd8] sm:$0xff]
        %v169 = vld [vmem:[%s119 + $0xe0] sm:$0xff]
        %v170 = vld [vmem:[%s119 + $0xe8] sm:$0xff]
        %v171 = vld [vmem:[%s119 + $0xf0] sm:$0xff]
        %v172 = vld [vmem:[%s119 + $0xf8] sm:$0xff]
        %v173 = vld [vmem:[%s119 + $0x100] sm:$0xff]
        %v174 = vld [vmem:[%s119 + $0x108] sm:$0xff]
        %v175 = vld [vmem:[%s119 + $0x110] sm:$0xff]
        %v176 = vld [vmem:[%s119 + $0x118] sm:$0xff]
        %v177 = vld [vmem:[%s119 + $0x120] sm:$0xff]
        %v178 = vld [vmem:[%s119 + $0x128] sm:$0xff]
        %v179 = vld [vmem:[%s119 + $0x130] sm:$0xff]
        %v180 = vld [vmem:[%s119 + $0x138] sm:$0xff]
        %v181 = vld [vmem:[%s119 + $0x140] sm:$0xff]
        %v182 = vld [vmem:[%s119 + $0x148] sm:$0xff]
        %v183 = vld [vmem:[%s119 + $0x150] sm:$0xff]
        %v184 = vld [vmem:[%s119 + $0x158] sm:$0xff]
        %v185 = vld [vmem:[%s119 + $0x160] sm:$0xff]
        %v186 = vld [vmem:[%s119 + $0x168] sm:$0xff]
        %v187 = vld [vmem:[%s119 + $0x170] sm:$0xff]
        %v188 = vld [vmem:[%s119 + $0x178] sm:$0xff]
        %v189 = vld [vmem:[%s119 + $0x180] sm:$0xff]
        %v190 = vld [vmem:[%s119 + $0x188] sm:$0xff]
        %v191 = vld [vmem:[%s119 + $0x190] sm:$0xff]
        %v192 = vld [vmem:[%s119 + $0x198] sm:$0xff]
        %v193 = vld [vmem:[%s119 + $0x1a0] sm:$0xff]
        %v194 = vld [vmem:[%s119 + $0x1a8] sm:$0xff]
        %v195 = vld [vmem:[%s119 + $0x1b0] sm:$0xff]
        %v196 = vld [vmem:[%s119 + $0x1b8] sm:$0xff]
        %v197 = vld [vmem:[%s119 + $0x1c0] sm:$0xff]
        %v198 = vld [vmem:[%s119 + $0x1c8] sm:$0xff]
        %v199 = vld [vmem:[%s119 + $0x1d0] sm:$0xff]
        %v200 = vld [vmem:[%s119 + $0x1d8] sm:$0xff]
        %v201 = vld [vmem:[%s119 + $0x1e0] sm:$0xff]
        %v202 = vld [vmem:[%s119 + $0x1e8] sm:$0xff]
        %v203 = vld [vmem:[%s119 + $0x1f0] sm:$0xff]
        %v204 = vld [vmem:[%s119 + $0x1f8] sm:$0xff]
        %v205 = vstv %s140
        %v206 = vmul.f32 %v141, %v205
        %v207 = vmul.f32 %v142, %v205
        %v208 = vmul.f32 %v143, %v205
        %v209 = vmul.f32 %v144, %v205
        %v210 = vmul.f32 %v145, %v205
        %v211 = vmul.f32 %v146, %v205
        %v212 = vmul.f32 %v147, %v205
        %v213 = vmul.f32 %v148, %v205
        %v214 = vmul.f32 %v149, %v205
        %v215 = vmul.f32 %v150, %v205
        %v216 = vmul.f32 %v151, %v205
        %v217 = vmul.f32 %v152, %v205
        %v218 = vmul.f32 %v153, %v205
        %v219 = vmul.f32 %v154, %v205
        %v220 = vmul.f32 %v155, %v205
        %v221 = vmul.f32 %v156, %v205
        %v222 = vmul.f32 %v157, %v205
        %v223 = vmul.f32 %v158, %v205
        %v224 = vmul.f32 %v159, %v205
        %v225 = vmul.f32 %v160, %v205
        %v226 = vmul.f32 %v161, %v205
        %v227 = vmul.f32 %v162, %v205
        %v228 = vmul.f32 %v163, %v205
        %v229 = vmul.f32 %v164, %v205
        %v230 = vmul.f32 %v165, %v205
        %v231 = vmul.f32 %v166, %v205
        %v232 = vmul.f32 %v167, %v205
        %v233 = vmul.f32 %v168, %v205
        %v234 = vmul.f32 %v169, %v205
        %v235 = vmul.f32 %v170, %v205
        %v236 = vmul.f32 %v171, %v205
        %v237 = vmul.f32 %v172, %v205
        %v238 = vmul.f32 %v173, %v205
        %v239 = vmul.f32 %v174, %v205
        %v240 = vmul.f32 %v175, %v205
        %v241 = vmul.f32 %v176, %v205
        %v242 = vmul.f32 %v177, %v205
        %v243 = vmul.f32 %v178, %v205
        %v244 = vmul.f32 %v179, %v205
        %v245 = vmul.f32 %v180, %v205
        %v246 = vmul.f32 %v181, %v205
        %v247 = vmul.f32 %v182, %v205
        %v248 = vmul.f32 %v183, %v205
        %v249 = vmul.f32 %v184, %v205
        %v250 = vmul.f32 %v185, %v205
        %v251 = vmul.f32 %v186, %v205
        %v252 = vmul.f32 %v187, %v205
        %v253 = vmul.f32 %v188, %v205
        %v254 = vmul.f32 %v189, %v205
        %v255 = vmul.f32 %v190, %v205
        %v256 = vmul.f32 %v191, %v205
        %v257 = vmul.f32 %v192, %v205
        %v258 = vmul.f32 %v193, %v205
        %v259 = vmul.f32 %v194, %v205
        %v260 = vmul.f32 %v195, %v205
        %v261 = vmul.f32 %v196, %v205
        %v262 = vmul.f32 %v197, %v205
        %v263 = vmul.f32 %v198, %v205
        %v264 = vmul.f32 %v199, %v205
        %v265 = vmul.f32 %v200, %v205
        %v266 = vmul.f32 %v201, %v205
        %v267 = vmul.f32 %v202, %v205
        %v268 = vmul.f32 %v203, %v205
        %v269 = vmul.f32 %v204, %v205
        %270 = vst [vmem:[%s137] sm:$0xff] %v206
        %271 = vst [vmem:[%s137 + $0x8] sm:$0xff] %v207
        %272 = vst [vmem:[%s137 + $0x10] sm:$0xff] %v208
        %273 = vst [vmem:[%s137 + $0x18] sm:$0xff] %v209
        %274 = vst [vmem:[%s137 + $0x20] sm:$0xff] %v210
        %275 = vst [vmem:[%s137 + $0x28] sm:$0xff] %v211
        %276 = vst [vmem:[%s137 + $0x30] sm:$0xff] %v212
        %277 = vst [vmem:[%s137 + $0x38] sm:$0xff] %v213
        %278 = vst [vmem:[%s137 + $0x40] sm:$0xff] %v214
        %279 = vst [vmem:[%s137 + $0x48] sm:$0xff] %v215
        %280 = vst [vmem:[%s137 + $0x50] sm:$0xff] %v216
        %281 = vst [vmem:[%s137 + $0x58] sm:$0xff] %v217
        %282 = vst [vmem:[%s137 + $0x60] sm:$0xff] %v218
        %283 = vst [vmem:[%s137 + $0x68] sm:$0xff] %v219
        %284 = vst [vmem:[%s137 + $0x70] sm:$0xff] %v220
        %285 = vst [vmem:[%s137 + $0x78] sm:$0xff] %v221
        %286 = vst [vmem:[%s137 + $0x80] sm:$0xff] %v222
        %287 = vst [vmem:[%s137 + $0x88] sm:$0xff] %v223
        %288 = vst [vmem:[%s137 + $0x90] sm:$0xff] %v224
        %289 = vst [vmem:[%s137 + $0x98] sm:$0xff] %v225
        %290 = vst [vmem:[%s137 + $0xa0] sm:$0xff] %v226
        %291 = vst [vmem:[%s137 + $0xa8] sm:$0xff] %v227
        %292 = vst [vmem:[%s137 + $0xb0] sm:$0xff] %v228
        %293 = vst [vmem:[%s137 + $0xb8] sm:$0xff] %v229
        %294 = vst [vmem:[%s137 + $0xc0] sm:$0xff] %v230
        %295 = vst [vmem:[%s137 + $0xc8] sm:$0xff] %v231
        %296 = vst [vmem:[%s137 + $0xd0] sm:$0xff] %v232
        %297 = vst [vmem:[%s137 + $0xd8] sm:$0xff] %v233
        %298 = vst [vmem:[%s137 + $0xe0] sm:$0xff] %v234
        %299 = vst [vmem:[%s137 + $0xe8] sm:$0xff] %v235
        %300 = vst [vmem:[%s137 + $0xf0] sm:$0xff] %v236
        %301 = vst [vmem:[%s137 + $0xf8] sm:$0xff] %v237
        %302 = vst [vmem:[%s137 + $0x100] sm:$0xff] %v238
        %303 = vst [vmem:[%s137 + $0x108] sm:$0xff] %v239
        %304 = vst [vmem:[%s137 + $0x110] sm:$0xff] %v240
        %305 = vst [vmem:[%s137 + $0x118] sm:$0xff] %v241
        %306 = vst [vmem:[%s137 + $0x120] sm:$0xff] %v242
        %307 = vst [vmem:[%s137 + $0x128] sm:$0xff] %v243
        %308 = vst [vmem:[%s137 + $0x130] sm:$0xff] %v244
        %309 = vst [vmem:[%s137 + $0x138] sm:$0xff] %v245
        %310 = vst [vmem:[%s137 + $0x140] sm:$0xff] %v246
        %311 = vst [vmem:[%s137 + $0x148] sm:$0xff] %v247
        %312 = vst [vmem:[%s137 + $0x150] sm:$0xff] %v248
        %313 = vst [vmem:[%s137 + $0x158] sm:$0xff] %v249
        %314 = vst [vmem:[%s137 + $0x160] sm:$0xff] %v250
        %315 = vst [vmem:[%s137 + $0x168] sm:$0xff] %v251
        %316 = vst [vmem:[%s137 + $0x170] sm:$0xff] %v252
        %317 = vst [vmem:[%s137 + $0x178] sm:$0xff] %v253
        %318 = vst [vmem:[%s137 + $0x180] sm:$0xff] %v254
        %319 = vst [vmem:[%s137 + $0x188] sm:$0xff] %v255
        %320 = vst [vmem:[%s137 + $0x190] sm:$0xff] %v256
        %321 = vst [vmem:[%s137 + $0x198] sm:$0xff] %v257
        %322 = vst [vmem:[%s137 + $0x1a0] sm:$0xff] %v258
        %323 = vst [vmem:[%s137 + $0x1a8] sm:$0xff] %v259
        %324 = vst [vmem:[%s137 + $0x1b0] sm:$0xff] %v260
        %325 = vst [vmem:[%s137 + $0x1b8] sm:$0xff] %v261
        %326 = vst [vmem:[%s137 + $0x1c0] sm:$0xff] %v262
        %327 = vst [vmem:[%s137 + $0x1c8] sm:$0xff] %v263
        %328 = vst [vmem:[%s137 + $0x1d0] sm:$0xff] %v264
        %329 = vst [vmem:[%s137 + $0x1d8] sm:$0xff] %v265
        %330 = vst [vmem:[%s137 + $0x1e0] sm:$0xff] %v266
        %331 = vst [vmem:[%s137 + $0x1e8] sm:$0xff] %v267
        %332 = vst [vmem:[%s137 + $0x1f0] sm:$0xff] %v268
        %333 = vst [vmem:[%s137 + $0x1f8] sm:$0xff] %v269
        %s334 = sand.u32 %s54, 1
        %s335 = scalar_lea.sflag [#allocation6], %s334
        %s336 = sand.u32 %s54, 1
        %s337 = smul.addr %s336, 512
        %s338 = scalar_lea.vmem [#allocation7], %s337
        // Predicated region
        $region29: #{tpu_custom_call.1} parent=23 // pred_check
          %p339 = pneg %p64
        $region30: #{tpu_custom_call.1} parent=23 // pred_check_branch
          %341 = sbr.rel (%p339) target = $region32
        $region31: #{tpu_custom_call.1} parent=23 // pred_region
          %s342 = smul.u32 8, %s20
          %s344 = ssub.s32 8192, 8192
          %345 = vsyncadd %s335, %s344
          %s346 = smul.addr %s342, 8
          %s347 = smul.addr %s346, 128
          %s348 = scalar_lea.hbm %s2, %s347
          %s349 = sshll.u32 %s338, 4
          %s350 = int_to_ptr.vmem [resolvable:$true] %s349
          %355 = dma.vmem_to_hbm [thread:$0]  %s350, 8192, %s348, %s335, 1024, 1024, 64
        $region32: #{tpu_custom_call.1} parent=23 // pred_fallthru
          _
      $region24: #{tpu_custom_call.1} parent=5 // pred_fallthru
        _
      %p356 = scmp.le.s32.totalorder 2, %s15
      // Predicated region
      $region33: #{tpu_custom_call.1} parent=5 // pred_check
        %p357 = pneg %p356
      $region34: #{tpu_custom_call.1} parent=5 // pred_check_branch
        %359 = sbr.rel (%p357) target = $region36
      $region35: #{tpu_custom_call.1} parent=5 // pred_region
        %s360 = ssub.s32 %s15, 2
        // Predicated region
        $region37: #{tpu_custom_call.1} parent=35 // pred_check
          %p361 = pneg %p70
        $region38: #{tpu_custom_call.1} parent=35 // pred_check_branch
          %363 = sbr.rel (%p361) target = $region40
        $region39: #{tpu_custom_call.1} parent=35 // pred_region
          %s364 = sand.u32 %s55, 1
          %s365 = scalar_lea.sflag [#allocation6], %s364
          %s366 = sand.u32 %s55, 1
          %s367 = smul.addr %s366, 512
          %s368 = scalar_lea.vmem [#allocation7], %s367
          %369 = dma.done %s365, 8192
        $region40: #{tpu_custom_call.1} parent=35 // pred_fallthru
          _
      $region36: #{tpu_custom_call.1} parent=5 // pred_fallthru
        _
    $region6: #{tpu_custom_call.1} parent=1 // loop_footer
      %s19 = sadd.s32 1, %s15
    $region7: #{tpu_custom_call.1} parent=1 // loop_footer_branch
      %14 = sbr.rel target = $region3
    $region8: #{tpu_custom_call.1} parent=1 // loop_exit
      _
    %370 = vsyncpa [#allocation5], 1
    %s371 = scalar_lea.sflag [#allocation5], 1
    %372 = vsyncpa %s371, 1
    %373 = vsyncpa [#allocation6], 1
    %s374 = scalar_lea.sflag [#allocation6], 1
    %375 = vsyncpa %s374, 1

</llo_original>
